<compile_context>
chip_gen: v7x
topology: tpu7x:2x2x1
jax: 0.10.0
libtpu: 0.0.40
codegen_flags: <defaults>
</compile_context>

<pallas_src>
import jax
import jax.numpy as jnp
from jax.experimental import pallas as pl
from jax.experimental.pallas import tpu as pltpu


def _grn_kernel(gamma_ref, beta_ref, avg_ref, x_ref, o_ref):
    x = x_ref[...]
    x32 = x.astype(jnp.float32)

    # gx[r] = ||x[r, :]||_2 over the (zero-padded) flattened spatial axis.
    gx = jnp.sqrt(jnp.sum(x32 * x32, axis=-1, keepdims=True))          # (rows, 1)

    # Per-batch mean of gx over its C contiguous rows: tiny block-diagonal
    # averaging matmul (MXU slot; keeps everything in (sublane, lane) layout).
    # avg_ref has a constant index_map, so it is resident in VMEM across steps.
    mean_gx = jnp.dot(avg_ref[...], gx, preferred_element_type=jnp.float32)

    # nx = gx / (mean_gx + 1e-6): EUP approx reciprocal + two Newton steps.
    denom = mean_gx + jnp.float32(1e-6)
    inv = pl.reciprocal(denom, approx=True)
    inv = inv * (2.0 - denom * inv)
    inv = inv * (2.0 - denom * inv)
    nx = gx * inv                                                      # (rows, 1)

    # gamma*(x*nx) + beta + x  ==  x * (gamma*nx + 1) + beta
    gamma = gamma_ref[0]
    beta = beta_ref[0]
    coeff = gamma * nx + 1.0                                           # (rows, 1)
    o_ref[...] = (x32 * coeff + beta).astype(o_ref.dtype)


def _tpu_generation():
    """Best-effort TPU generation sniff (falls back to v6e-style policy)."""
    try:
        kind = jax.devices()[0].device_kind.lower()
    except Exception:
        return 6
    for g in (7, 6, 5, 4, 3, 2):
        if str(g) in kind:
            return g
    return 6


def _pick_batches_per_block(n, c, hw_pad, itemsize, *,
                            target_block_bytes, min_grid_steps):
    """Whole batch elements per grid step.

    The block sublane extent (nb*c) must be a multiple of 8 or cover the full
    array ((8,128) BlockSpec rule).  Within that, take the largest block
    inside the byte budget; on multi-TensorCore chips prefer a block small
    enough that the grid has >= min_grid_steps steps so the "parallel" axis
    can feed every core.
    """
    candidates = []
    for nb in range(1, n + 1):
        if n % nb:
            continue
        rows = nb * c
        if rows % 8 != 0 and nb != n:
            continue
        candidates.append(nb)
    # nb == n is always a candidate, so candidates is never empty.

    def block_bytes(nb):
        return nb * c * hw_pad * itemsize

    fitting = [nb for nb in candidates if block_bytes(nb) <= target_block_bytes]
    multi = [nb for nb in fitting if n // nb >= min_grid_steps]
    if multi:
        return max(multi)
    if fitting:
        return max(fitting)
    return min(candidates)


def grn_pallas(x_nchw, gamma, beta):
    """x_nchw: (N, C, H, W); gamma, beta: shape (1,) scalars (as in the module)."""
    N, C, H, W = x_nchw.shape
    HW = H * W

    # Free (no data movement) fold: (N, C, H, W) -> (N*C, H*W), then zero-pad
    # the lane axis to a multiple of 128 so stores are unmasked/lane-dense.
    # Zero padding does not change the sum of squares, and the padded output
    # lanes are sliced off below.
    x2d = x_nchw.reshape(N * C, HW)
    HW_pad = max(128, ((HW + 127) // 128) * 128)
    if HW_pad != HW:
        x2d = jnp.pad(x2d, ((0, 0), (0, HW_pad - HW)))

    gen = _tpu_generation()
    if gen >= 7:
        # v7x: 2 TCs per chip, 64 MiB physical / 32 MiB scoped VMEM.
        num_cores = 2
        target_block_bytes = 2 * 1024 * 1024
        vmem_limit = 32 * 1024 * 1024
    else:
        # v5e / v6e: 1 TC, 128 MiB physical VMEM -> go for big streaming blocks.
        num_cores = 1
        target_block_bytes = 8 * 1024 * 1024
        vmem_limit = 64 * 1024 * 1024

    nb = _pick_batches_per_block(
        N, C, HW_pad, x2d.dtype.itemsize,
        target_block_bytes=target_block_bytes, min_grid_steps=num_cores)
    rows_per_block = nb * C
    grid = (N // nb,)

    # VMEM footprint guard: double-buffered in + out (4x block) plus ~3
    # block-sized f32 temporaries inside the body.
    block_bytes = rows_per_block * HW_pad * x2d.dtype.itemsize
    f32_block = rows_per_block * HW_pad * 4
    if 4 * block_bytes + 3 * f32_block > vmem_limit:
        # TODO(synk): add an HW (lane) tiling pass with a (rows,1) sum-of-squares
        # accumulator + second epilogue pass for very large C*H*W inputs.
        raise NotImplementedError(
            "GRN block does not fit the VMEM budget; HW (lane) tiling is not "
            "implemented for this shape.")

    # Block-diagonal per-batch averaging matrix, precomputed once (resident in
    # VMEM via a constant index_map; no per-step rebuild).
    row_group = jnp.arange(rows_per_block, dtype=jnp.int32) // C
    avg_mat = jnp.where(row_group[:, None] == row_group[None, :],
                        jnp.float32(1.0 / C), jnp.float32(0.0))

    out2d = pl.pallas_call(
        _grn_kernel,
        out_shape=jax.ShapeDtypeStruct((N * C, HW_pad), x_nchw.dtype),
        grid=grid,
        in_specs=[
            pl.BlockSpec(memory_space=pltpu.SMEM),                      # gamma (1,)
            pl.BlockSpec(memory_space=pltpu.SMEM),                      # beta  (1,)
            pl.BlockSpec((rows_per_block, rows_per_block),
                         lambda g: (0, 0)),                             # avg_mat (resident)
            pl.BlockSpec((rows_per_block, HW_pad), lambda g: (g, 0)),   # x block
        ],
        out_specs=pl.BlockSpec((rows_per_block, HW_pad), lambda g: (g, 0)),
        compiler_params=pltpu.CompilerParams(
            dimension_semantics=("parallel",),
            vmem_limit_bytes=vmem_limit,
        ),
    )(gamma, beta, avg_mat, x2d)

    if HW_pad != HW:
        out2d = out2d[:, :HW]
    return out2d.reshape(N, C, H, W)


def grn_reference(x, gamma, beta):
    """Pure-JAX reference mirroring the PyTorch forward (NCHW)."""
    gx = jnp.sqrt(jnp.sum(x.astype(jnp.float32) ** 2, axis=(2, 3), keepdims=True))
    nx = gx / (jnp.mean(gx, axis=1, keepdims=True) + 1e-6)
    return (gamma * (x * nx) + beta + x).astype(x.dtype)


if __name__ == "__main__":
    key = jax.random.PRNGKey(0)
    N, C, H, W = 2, 4, 16, 16
    x = jax.random.normal(key, (N, C, H, W), dtype=jnp.float32)

    # Deterministic parameter init, matching nn.Parameter(torch.zeros(1)).
    gamma = jnp.zeros((1,), dtype=jnp.float32)
    beta = jnp.zeros((1,), dtype=jnp.float32)

    out = grn_pallas(x, gamma, beta)
    jax.block_until_ready(out)
    ref = grn_reference(x, gamma, beta)
    assert out.shape == (N, C, H, W)
    assert jnp.allclose(out, ref, atol=1e-5, rtol=1e-5), "mismatch vs reference"

    # Non-trivial gamma/beta so the normalization path is actually exercised
    # (zeros make the module an identity).
    gamma2 = jnp.array([0.5], dtype=jnp.float32)
    beta2 = jnp.array([-0.25], dtype=jnp.float32)
    out2 = grn_pallas(x, gamma2, beta2)
    jax.block_until_ready(out2)
    ref2 = grn_reference(x, gamma2, beta2)
    assert jnp.allclose(out2, ref2, atol=1e-5, rtol=1e-5), "mismatch (nonzero params)"

    # Non-128-multiple spatial size exercises the lane-padding path.
    x3 = jax.random.normal(jax.random.PRNGKey(1), (2, 4, 7, 7), dtype=jnp.float32)
    out3 = grn_pallas(x3, gamma2, beta2)
    jax.block_until_ready(out3)
    ref3 = grn_reference(x3, gamma2, beta2)
    assert jnp.allclose(out3, ref3, atol=1e-5, rtol=1e-5), "mismatch (padded HW)"

    print("KERNEL_OK")
</pallas_src>

<mosaic_0001>
module attributes {stable_mosaic.version = 11 : i64} {
  func.func @_grn_kernel(%arg0: i32, %arg1: memref<1xf32, #tpu.memory_space<smem>>, %arg2: memref<1xf32, #tpu.memory_space<smem>>, %arg3: memref<8x8xf32, #tpu.memory_space<vmem>>, %arg4: memref<8x256xf32, #tpu.memory_space<vmem>>, %arg5: memref<8x256xf32, #tpu.memory_space<vmem>>) attributes {dimension_semantics = [#tpu.dimension_semantics<parallel>], iteration_bounds = array<i64: 1>, scalar_prefetch = 0 : i64, scratch_operands = 0 : i64, tpu.core_type = #tpu.core_type<tc>, window_params = [{transform_indices = @transform_0, window_bounds = array<i64: 1>}, {transform_indices = @transform_1, window_bounds = array<i64: 1>}, {pipeline_mode = #tpu.pipeline_mode<synchronous>, transform_indices = @transform_2, window_bounds = array<i64: 8, 8>}, {transform_indices = @transform_3, window_bounds = array<i64: 8, 256>}, {transform_indices = @transform_4, window_bounds = array<i64: 8, 256>}]} {
    %c0 = arith.constant 0 : index
    %c0_0 = arith.constant 0 : index
    %0 = vector.load %arg4[%c0, %c0_0] : memref<8x256xf32, #tpu.memory_space<vmem>>, vector<8x256xf32>
    %1 = arith.mulf %0, %0 : vector<8x256xf32>
    %cst = arith.constant dense<0.000000e+00> : vector<8xf32>
    %2 = vector.multi_reduction <add>, %1, %cst [1] : vector<8x256xf32> to vector<8xf32>
    %3 = vector.shape_cast %2 : vector<8xf32> to vector<8x1xf32>
    %4 = math.sqrt %3 : vector<8x1xf32>
    %c0_1 = arith.constant 0 : index
    %c0_2 = arith.constant 0 : index
    %5 = vector.load %arg3[%c0_1, %c0_2] : memref<8x8xf32, #tpu.memory_space<vmem>>, vector<8x8xf32>
    %cst_3 = arith.constant dense<0.000000e+00> : vector<8x1xf32>
    %6 = tpu.matmul %5, %4, %cst_3 {dimension_numbers = #tpu.dot_dimension_numbers<[1], [0], [0], [1], [0, 0, 1, 1], [], []>} : vector<8x8xf32>, vector<8x1xf32>, vector<8x1xf32> -> vector<8x1xf32>
    %cst_4 = arith.constant 9.99999997E-7 : f32
    %7 = vector.broadcast %cst_4 : f32 to vector<8x1xf32>
    %8 = arith.addf %6, %7 : vector<8x1xf32>
    %9 = tpu.reciprocal %8 {approx = true} : vector<8x1xf32> -> vector<8x1xf32>
    %10 = arith.mulf %8, %9 : vector<8x1xf32>
    %cst_5 = arith.constant 2.000000e+00 : f32
    %11 = vector.broadcast %cst_5 : f32 to vector<8x1xf32>
    %12 = arith.subf %11, %10 : vector<8x1xf32>
    %13 = arith.mulf %9, %12 : vector<8x1xf32>
    %14 = arith.mulf %8, %13 : vector<8x1xf32>
    %cst_6 = arith.constant 2.000000e+00 : f32
    %15 = vector.broadcast %cst_6 : f32 to vector<8x1xf32>
    %16 = arith.subf %15, %14 : vector<8x1xf32>
    %17 = arith.mulf %13, %16 : vector<8x1xf32>
    %18 = arith.mulf %4, %17 : vector<8x1xf32>
    %c0_7 = arith.constant 0 : index
    %19 = memref.load %arg1[%c0_7] : memref<1xf32, #tpu.memory_space<smem>>
    %c0_8 = arith.constant 0 : index
    %20 = memref.load %arg2[%c0_8] : memref<1xf32, #tpu.memory_space<smem>>
    %21 = vector.broadcast %19 : f32 to vector<8x1xf32>
    %22 = arith.mulf %21, %18 : vector<8x1xf32>
    %cst_9 = arith.constant 1.000000e+00 : f32
    %23 = vector.broadcast %cst_9 : f32 to vector<8x1xf32>
    %24 = arith.addf %22, %23 : vector<8x1xf32>
    %25 = vector.broadcast %24 : vector<8x1xf32> to vector<8x256xf32>
    %26 = arith.mulf %0, %25 : vector<8x256xf32>
    %27 = vector.broadcast %20 : f32 to vector<8x256xf32>
    %28 = arith.addf %26, %27 : vector<8x256xf32>
    %c0_10 = arith.constant 0 : index
    %c0_11 = arith.constant 0 : index
    %29 = vector.load %arg5[%c0_10, %c0_11] : memref<8x256xf32, #tpu.memory_space<vmem>>, vector<8x256xf32>
    tpu.vector_store %arg5[%c0_10, %c0_11], %28 {strides = array<i32>} : memref<8x256xf32, #tpu.memory_space<vmem>>, vector<8x256xf32>,
    return
  }
  func.func @transform_0(%arg0: i32) -> i32 {
    %c0_i32 = arith.constant 0 : i32
    %c0_i32_0 = arith.constant 0 : i32
    return %c0_i32 : i32
  }
  func.func @transform_1(%arg0: i32) -> i32 {
    %c0_i32 = arith.constant 0 : i32
    %c0_i32_0 = arith.constant 0 : i32
    return %c0_i32 : i32
  }
  func.func @transform_2(%arg0: i32) -> (i32, i32) {
    %c0_i32 = arith.constant 0 : i32
    %c0_i32_0 = arith.constant 0 : i32
    %c0_i32_1 = arith.constant 0 : i32
    return %c0_i32, %c0_i32_0 : i32, i32
  }
  func.func @transform_3(%arg0: i32) -> (i32, i32) {
    %c0_i32 = arith.constant 0 : i32
    %c0_i32_0 = arith.constant 0 : i32
    return %arg0, %c0_i32 : i32, i32
  }
  func.func @transform_4(%arg0: i32) -> (i32, i32) {
    %c0_i32 = arith.constant 0 : i32
    %c0_i32_0 = arith.constant 0 : i32
    return %arg0, %c0_i32 : i32, i32
  }
}

</mosaic_0001>

<llo_original>
// kernel: tpu_custom_call.1
$region0: #{tpu_custom_call.1}
  #allocation0 [shape = 'u32[]', space=smem, size = 0x4, offset = 0x4, fixed_abs, tag = 'smem constant byte address 0x4 - core index']
  #allocation1 [shape = 'u32[144,128]{1,0:T(1,128)}', space=vmem, size = 0x12000, scoped, tag = 'internal scratch']
  #allocation2 [shape = 'f32[1]{0:T(128)S(6)}', space=smem, size = 0x200, scoped, tag = 'scoped memory for tpu_custom_call.1']
  #allocation3 [shape = 'f32[1]{0:T(128)S(6)}', space=smem, size = 0x200, scoped, tag = 'scoped memory for tpu_custom_call.1']
  %s0 = inlined_call_operand.<no memory space> [shape: f32[1], index: 0, kind: input, shape index: {}]
  %s1 = inlined_call_operand.<no memory space> [shape: f32[1], index: 1, kind: input, shape index: {}]
  %s2 = inlined_call_operand.hbm [shape: f32[8,8], index: 2, kind: input, shape index: {}]
  %s3 = inlined_call_operand.hbm [shape: f32[8,256], index: 3, kind: input, shape index: {}]
  %s4 = inlined_call_operand.hbm [shape: f32[8,256], index: 4, kind: output, shape index: {}]
  %s5 = sld [smem:[#allocation0]]
  $region34: #{tpu_custom_call.1} parent=0
    _
  %s7 = ssub.s32 1, %s5
  %s8 = scalar_select 0, %s7, %s5
  %9 = sst [smem:[#allocation2]] %s0
  %10 = sst [smem:[#allocation3]] %s1
  $region1: #{tpu_custom_call.1} parent=0
    #allocation4 [shape = 'u8[4096]{0}', space=vmem, size = 0x1000, scoped, tag = 'input window, operand 2, single buffered']
    #allocation5 [shape = 's32[1]{0}', space=sflag, size = 0x4, scoped, tag = 'scoped memory for tpu_custom_call.1']
    #allocation6 [shape = 's32[1]{0}', space=sflag, size = 0x4, scoped, tag = 'scoped memory for tpu_custom_call.1']
    #allocation7 [shape = 'u8[8192]{0}', space=vmem, size = 0x2000, scoped, tag = 'input window, operand 3, single buffered']
    #allocation8 [shape = 's32[1]{0}', space=sflag, size = 0x4, scoped, tag = 'scoped memory for tpu_custom_call.1']
    #allocation9 [shape = 'u8[8192]{0}', space=vmem, size = 0x2000, scoped, tag = 'output window, operand 0, single buffered']
    %11 = vsyncpa [#allocation5], 0
    %12 = vsyncpa [#allocation8], 0
    %13 = vsyncpa [#allocation6], 0
    // Predicated region
    $region2: #{tpu_custom_call.1} parent=1 // pred_check
      _
    $region3: #{tpu_custom_call.1} parent=1 // pred_check_branch
      %15 = sbr.rel (0) target = $region5
    $region4: #{tpu_custom_call.1} parent=1 // pred_region
      _
    $region5: #{tpu_custom_call.1} parent=1 // pred_fallthru
      _
    // Predicated region
    $region6: #{tpu_custom_call.1} parent=1 // pred_check
      _
    $region7: #{tpu_custom_call.1} parent=1 // pred_check_branch
      %17 = sbr.rel (0) target = $region9
    $region8: #{tpu_custom_call.1} parent=1 // pred_region
      _
    $region9: #{tpu_custom_call.1} parent=1 // pred_fallthru
      _
    // Predicated region
    $region10: #{tpu_custom_call.1} parent=1 // pred_check
      _
    $region11: #{tpu_custom_call.1} parent=1 // pred_check_branch
      %19 = sbr.rel (0) target = $region13
    $region12: #{tpu_custom_call.1} parent=1 // pred_region
      %s21 = ssub.s32 128, 128
      %22 = vsyncadd [#allocation5], %s21
      %s24 = sshll.u32 [#allocation4], 4
      %s25 = int_to_ptr.vmem [resolvable:$true] %s24
      %27 = dma.hbm_to_vmem [thread:$0]  %s2, 128, %s25, [#allocation5]
    $region13: #{tpu_custom_call.1} parent=1 // pred_fallthru
      _
    // Predicated region
    $region14: #{tpu_custom_call.1} parent=1 // pred_check
      _
    $region15: #{tpu_custom_call.1} parent=1 // pred_check_branch
      %29 = sbr.rel (0) target = $region17
    $region16: #{tpu_custom_call.1} parent=1 // pred_region
      %s31 = ssub.s32 256, 256
      %32 = vsyncadd [#allocation8], %s31
      %s34 = sshll.u32 [#allocation7], 4
      %s35 = int_to_ptr.vmem [resolvable:$true] %s34
      %37 = dma.hbm_to_vmem [thread:$0]  %s3, 256, %s35, [#allocation8]
    $region17: #{tpu_custom_call.1} parent=1 // pred_fallthru
      _
    // Predicated region
    $region18: #{tpu_custom_call.1} parent=1 // pred_check
      _
    $region19: #{tpu_custom_call.1} parent=1 // pred_check_branch
      %39 = sbr.rel (0) target = $region21
    $region20: #{tpu_custom_call.1} parent=1 // pred_region
      %40 = dma.done [#allocation5], 128
    $region21: #{tpu_custom_call.1} parent=1 // pred_fallthru
      _
    // Predicated region
    $region22: #{tpu_custom_call.1} parent=1 // pred_check
      _
    $region23: #{tpu_custom_call.1} parent=1 // pred_check_branch
      %42 = sbr.rel (0) target = $region25
    $region24: #{tpu_custom_call.1} parent=1 // pred_region
      %43 = dma.done [#allocation8], 256
    $region25: #{tpu_custom_call.1} parent=1 // pred_fallthru
      _
    %v44 = vld [vmem:[#allocation7] sm:$0xff]
    %v45 = vld [vmem:[#allocation7 + $0x8] sm:$0xff]
    %v46 = vmul.f32 %v44, %v44
    %v47 = vmul.f32 %v45, %v45
    %v48 = vadd.f32 %v46, %v47
    %49 = vadd.xlane.f32.xlu0 %v48
    %v50 = vpop.xlane.xlu0 %49
    %v51 = vrsqrt.pop %v50
    %v52 = vmul.f32 %v50, %v51
    %vm53 = vcmp.eq.f32.partialorder %v50, inf
    %v54 = vsel %vm53, %v50, %v52
    %vm55 = vcmp.eq.f32.partialorder %v50, 0.0
    %v56 = vand.u32 %v50, 2147483648
    %v57 = vsel %vm55, %v56, %v54
    %v58 = vld [vmem:[#allocation4] sm:$0xff]
    %vm59 = vcmask 64512
    %v61 = vsel %vm59, %v58, 0
    %63 = vmatprep.subr.mxu0 0.0
    %64 = vmatpush1.msra.mxu0 %v57
    %65 = vmatprep.subr.mxu0 0.0
    %66 = vmatpush1.msra.mxu0 0.0
    %67 = vmatprep.subr.mxu0 0.0
    %68 = vmatpush1.msra.mxu0 0.0
    %69 = vmatprep.subr.mxu0 0.0
    %70 = vmatpush1.msra.mxu0 0.0
    %71 = vmatprep.subr.mxu0 0.0
    %72 = vmatpush1.msra.mxu0 0.0
    %73 = vmatprep.subr.mxu0 0.0
    %74 = vmatpush1.msra.mxu0 0.0
    %75 = vmatprep.subr.mxu0 0.0
    %76 = vmatpush1.msra.mxu0 0.0
    %77 = vmatprep.subr.mxu0 0.0
    %78 = vmatpush1.msra.mxu0 0.0
    %79 = vmatprep.subr.mxu0 0.0
    %80 = vmatpush1.msra.mxu0 0.0
    %81 = vmatprep.subr.mxu0 0.0
    %82 = vmatpush1.msra.mxu0 0.0
    %83 = vmatprep.subr.mxu0 0.0
    %84 = vmatpush1.msra.mxu0 0.0
    %85 = vmatprep.subr.mxu0 0.0
    %86 = vmatpush1.msra.mxu0 0.0
    %87 = vmatprep.subr.mxu0 0.0
    %88 = vmatpush1.msra.mxu0 0.0
    %89 = vmatprep.subr.mxu0 0.0
    %90 = vmatpush1.msra.mxu0 0.0
    %91 = vmatprep.subr.mxu0 0.0
    %92 = vmatpush1.msra.mxu0 0.0
    %93 = vmatprep.subr.mxu0 0.0
    %94 = vmatpush1.msra.mxu0 0.0
    %95 = vmatprep.subr.mxu0 0.0
    %96 = vmatpush1.msra.mxu0 0.0
    %97 = vmatprep.subr.mxu0 0.0
    %98 = vmatpush1.msra.mxu0 0.0
    %99 = vmatprep.subr.mxu0 0.0
    %100 = vmatpush1.msra.mxu0 0.0
    %101 = vmatprep.subr.mxu0 0.0
    %102 = vmatpush1.msra.mxu0 0.0
    %103 = vmatprep.subr.mxu0 0.0
    %104 = vmatpush1.msra.mxu0 0.0
    %105 = vmatprep.subr.mxu0 0.0
    %106 = vmatpush1.msra.mxu0 0.0
    %107 = vmatprep.subr.mxu0 0.0
    %108 = vmatpush1.msra.mxu0 0.0
    %109 = vmatprep.subr.mxu0 0.0
    %110 = vmatpush1.msra.mxu0 0.0
    %111 = vmatprep.subr.mxu0 0.0
    %112 = vmatpush1.msra.mxu0 0.0
    %113 = vmatprep.subr.mxu0 0.0
    %114 = vmatpush1.msra.mxu0 0.0
    %115 = vmatprep.subr.mxu0 0.0
    %116 = vmatpush1.msra.mxu0 0.0
    %117 = vmatprep.subr.mxu0 0.0
    %118 = vmatpush1.msra.mxu0 0.0
    %119 = vmatprep.subr.mxu0 0.0
    %120 = vmatpush1.msra.mxu0 0.0
    %121 = vmatprep.subr.mxu0 0.0
    %122 = vmatpush1.msra.mxu0 0.0
    %123 = vmatprep.subr.mxu0 0.0
    %124 = vmatpush1.msra.mxu0 0.0
    %125 = vmatprep.subr.mxu0 0.0
    %126 = vmatpush1.msra.mxu0 0.0
    %127 = vmatprep.mubr.f32.mxu0 0.0
    %128 = vmatmul.mubr.f32.gmra.mrb[0].mxu0 %v61
    %v129 = vpop.f32.mrb[0].mxu0
    %v130 = vadd.f32 1e-06, %v129
    %v131 = vpop.f32.mrb[0].mxu0
    %132 = vdwg.mxu0
    %v133 = vrcp.pop %v130
    %v134 = vmul.f32 %v130, %v133
    %v135 = vsub.f32 2.0, %v134
    %v136 = vmul.f32 %v133, %v135
    %v137 = vmul.f32 %v130, %v136
    %v138 = vsub.f32 2.0, %v137
    %v139 = vmul.f32 %v136, %v138
    %v140 = vmul.f32 %v57, %v139
    %s141 = sld [smem:[#allocation2]]
    %s142 = sld [smem:[#allocation3]]
    %v143 = vstv %s141
    %v144 = vmul.f32 %v143, %v140
    %v145 = vadd.f32 %v144, 1.0
    %147 = vset.pattern.permute.xlu0 0
    %148 = vperm.xlu0 %147, %v145
    %v149 = vpop.permute.xlu0 %148
    %v151 = vmul.f32 %v44, %v149
    %v152 = vmul.f32 %v45, %v149
    %v153 = vstv %s142
    %v154 = vadd.f32 %v151, %v153
    %v155 = vadd.f32 %v152, %v153
    %156 = vst [vmem:[#allocation9] sm:$0xff] %v154
    %157 = vst [vmem:[#allocation9 + $0x8] sm:$0xff] %v155
    // Predicated region
    $region26: #{tpu_custom_call.1} parent=1 // pred_check
      _
    $region27: #{tpu_custom_call.1} parent=1 // pred_check_branch
      %159 = sbr.rel (0) target = $region29
    $region28: #{tpu_custom_call.1} parent=1 // pred_region
      %s161 = ssub.s32 256, 256
      %162 = vsyncadd [#allocation6], %s161
      %s164 = sshll.u32 [#allocation9], 4
      %s165 = int_to_ptr.vmem [resolvable:$true] %s164
      %167 = dma.vmem_to_hbm [thread:$0]  %s165, 256, %s4, [#allocation6]
    $region29: #{tpu_custom_call.1} parent=1 // pred_fallthru
      _
    // Predicated region
    $region30: #{tpu_custom_call.1} parent=1 // pred_check
      _
    $region31: #{tpu_custom_call.1} parent=1 // pred_check_branch
      %169 = sbr.rel (0) target = $region33
    $region32: #{tpu_custom_call.1} parent=1 // pred_region
      %170 = dma.done [#allocation6], 256
    $region33: #{tpu_custom_call.1} parent=1 // pred_fallthru
      _
    %171 = vsyncpa [#allocation5], 1
    %172 = vsyncpa [#allocation8], 1
    %173 = vsyncpa [#allocation6], 1

</llo_original>
